<compile_context>
chip_gen: v7x
topology: tpu7x:2x2x1
jax: 0.10.0
libtpu: 0.0.40
codegen_flags: <defaults>
</compile_context>

<pallas_src>
import functools
import math

import jax
import jax.numpy as jnp
from jax.experimental import pallas as pl
from jax.experimental.pallas import tpu as pltpu

_VMEM_LIMIT = 32 * 1024 * 1024  # safe on v5e/v6e (128 MiB phys) and v7x (64 MiB)
_HIGHEST = jax.lax.Precision.HIGHEST


def _cdiv(a, b):
    return -(-a // b)


def _round_up(n, m):
    return ((n + m - 1) // m) * m


def _pick_block_rows(rows, d, itemsize, *, target_bytes=4 << 20, max_rows=8192):
    """~target_bytes per x block, multiple of 8 sublanes, >=2 blocks if possible."""
    block_rows = max(8, min(max_rows, (target_bytes // max(d * itemsize, 1)) // 8 * 8))
    block_rows = min(block_rows, _round_up(rows, 8))
    if rows >= 16 and _cdiv(rows, block_rows) < 2:
        # Keep at least 2 blocks so both v7x TensorCores get work.
        block_rows = max(8, _round_up(_cdiv(rows, 2), 8))
    return block_rows


# ----------------------------------------------------------------------------
# Standalone LayerNorm kernel
# ----------------------------------------------------------------------------
def _layernorm_kernel(x_ref, g_ref, b_ref, o_ref, *, eps, inv_d):
    """x_ref: (TR, D) rows; g_ref/b_ref: (1, D); o_ref: (TR, D)."""
    x = x_ref[...].astype(jnp.float32)
    ones = jnp.ones((x.shape[-1], 1), dtype=jnp.float32)
    # Row reductions on the (otherwise idle) MXU -> keeps the XLU slot free.
    mean = jnp.dot(x, ones, preferred_element_type=jnp.float32,
                   precision=_HIGHEST) * inv_d
    xc = x - mean
    var = jnp.dot(xc * xc, ones, preferred_element_type=jnp.float32,
                  precision=_HIGHEST) * inv_d                   # biased, like torch
    inv_std = jax.lax.rsqrt(var + eps)                          # EUP
    o_ref[...] = (xc * inv_std * g_ref[...] + b_ref[...]).astype(o_ref.dtype)


def layer_norm(x, gamma, beta, *, eps=1e-5, block_rows=None):
    """LayerNorm over the last dim of x (any leading shape), Pallas on TPU."""
    orig_shape = x.shape
    D = orig_shape[-1]
    rows = math.prod(orig_shape[:-1]) if len(orig_shape) > 1 else 1
    x2 = x.reshape(rows, D)
    g2 = gamma.reshape(1, D).astype(jnp.float32)
    b2 = beta.reshape(1, D).astype(jnp.float32)

    itemsize = jnp.dtype(x.dtype).itemsize
    if block_rows is None:
        block_rows = _pick_block_rows(rows, D, itemsize)
    num_blocks = _cdiv(rows, block_rows)

    # NOTE: if D is not a multiple of 128 the output stores become lane-masked;
    # pad D to 128 at the model level for best streaming throughput.
    kernel = functools.partial(_layernorm_kernel, eps=float(eps), inv_d=1.0 / D)
    out = pl.pallas_call(
        kernel,
        out_shape=jax.ShapeDtypeStruct((rows, D), x.dtype),
        grid_spec=pltpu.PrefetchScalarGridSpec(
            num_scalar_prefetch=0,
            grid=(num_blocks,),
            in_specs=[
                pl.BlockSpec((block_rows, D), lambda i: (i, 0)),   # x rows
                pl.BlockSpec((1, D), lambda i: (0, 0)),            # gamma
                pl.BlockSpec((1, D), lambda i: (0, 0)),            # beta
            ],
            out_specs=pl.BlockSpec((block_rows, D), lambda i: (i, 0)),
        ),
        compiler_params=pltpu.CompilerParams(
            dimension_semantics=("parallel",),
            vmem_limit_bytes=_VMEM_LIMIT,
        ),
        cost_estimate=pl.CostEstimate(
            flops=9 * rows * D,
            transcendentals=rows,
            bytes_accessed=2 * rows * D * itemsize + 2 * D * 4,
        ),
    )(x2, g2, b2)
    return out.reshape(orig_shape)


def pre_norm(x, gamma, beta, fn, *, eps=1e-5, **kwargs):
    """PreNorm.forward: fn(LayerNorm(x), **kwargs) for an arbitrary JAX `fn`."""
    # TODO(synk): `fn` is the arbitrary wrapped sub-module (attention / MLP /
    # ...); with no fixed definition it is applied as a user-supplied callable.
    # Use pre_norm_linear() below when fn starts with a linear projection.
    return fn(layer_norm(x, gamma, beta, eps=eps), **kwargs)


# ----------------------------------------------------------------------------
# Fused LayerNorm + Linear kernel (common "fn = Linear(...)" first stage)
# ----------------------------------------------------------------------------
def _prenorm_linear_kernel(x_ref, g_ref, b_ref, w_ref, wb_ref, o_ref, xn_ref,
                           *, eps, inv_d):
    """Normalize the x row-block once (at j==0) into VMEM scratch, then matmul."""
    @pl.when(pl.program_id(1) == 0)
    def _():
        x = x_ref[...].astype(jnp.float32)
        ones = jnp.ones((x.shape[-1], 1), dtype=jnp.float32)
        mean = jnp.dot(x, ones, preferred_element_type=jnp.float32,
                       precision=_HIGHEST) * inv_d
        xc = x - mean
        var = jnp.dot(xc * xc, ones, preferred_element_type=jnp.float32,
                      precision=_HIGHEST) * inv_d
        xn_ref[...] = (xc * jax.lax.rsqrt(var + eps) * g_ref[...]
                       + b_ref[...]).astype(xn_ref.dtype)

    o_ref[...] = (
        jnp.dot(xn_ref[...], w_ref[...], preferred_element_type=jnp.float32,
                precision=_HIGHEST)
        + wb_ref[...]
    ).astype(o_ref.dtype)


def pre_norm_linear(x, gamma, beta, w, bias, *, eps=1e-5,
                    block_rows=None, block_n=None):
    """fn(LayerNorm(x)) with fn = Linear(w, bias), fully fused in one kernel."""
    orig_shape = x.shape
    D = orig_shape[-1]
    N = w.shape[-1]
    rows = math.prod(orig_shape[:-1]) if len(orig_shape) > 1 else 1
    x2 = x.reshape(rows, D)
    g2 = gamma.reshape(1, D).astype(jnp.float32)
    b2 = beta.reshape(1, D).astype(jnp.float32)
    wb2 = bias.reshape(1, N).astype(jnp.float32)

    itemsize = jnp.dtype(x.dtype).itemsize
    if block_rows is None:
        block_rows = _pick_block_rows(rows, D, itemsize,
                                      target_bytes=2 << 20, max_rows=2048)
    if block_n is None:
        block_n = min(N, 512) if N % 128 == 0 else N
    grid = (_cdiv(rows, block_rows), _cdiv(N, block_n))

    kernel = functools.partial(_prenorm_linear_kernel, eps=float(eps), inv_d=1.0 / D)
    out = pl.pallas_call(
        kernel,
        out_shape=jax.ShapeDtypeStruct((rows, N), x.dtype),
        grid_spec=pltpu.PrefetchScalarGridSpec(
            num_scalar_prefetch=0,
            grid=grid,
            in_specs=[
                pl.BlockSpec((block_rows, D), lambda i, j: (i, 0)),   # x rows
                pl.BlockSpec((1, D), lambda i, j: (0, 0)),            # gamma
                pl.BlockSpec((1, D), lambda i, j: (0, 0)),            # beta
                pl.BlockSpec((D, block_n), lambda i, j: (0, j)),      # weight
                pl.BlockSpec((1, block_n), lambda i, j: (0, j)),      # proj bias
            ],
            out_specs=pl.BlockSpec((block_rows, block_n), lambda i, j: (i, j)),
            scratch_shapes=[pltpu.VMEM((block_rows, D), x.dtype)],    # LN(x) tile
        ),
        compiler_params=pltpu.CompilerParams(
            dimension_semantics=("parallel", "arbitrary"),
            vmem_limit_bytes=_VMEM_LIMIT,
        ),
        cost_estimate=pl.CostEstimate(
            flops=2 * rows * D * N + 9 * rows * D,
            transcendentals=rows,
            bytes_accessed=(rows * D * itemsize
                            + D * N * jnp.dtype(w.dtype).itemsize
                            + rows * N * itemsize),
        ),
    )(x2, g2, b2, w, wb2)
    return out.reshape(orig_shape[:-1] + (N,))


# ----------------------------------------------------------------------------
# Demo / correctness check
# ----------------------------------------------------------------------------
if __name__ == "__main__":
    key = jax.random.PRNGKey(0)
    kx, kg, kb, kw, kbias = jax.random.split(key, 5)

    # batch=2, seq=8, hidden dim=128 (lane-dense feature axis).
    B, S, D = 2, 8, 128
    x = jax.random.normal(kx, (B, S, D), dtype=jnp.float32)

    # LayerNorm affine params (randomized so the affine path is exercised).
    gamma = 1.0 + 0.1 * jax.random.normal(kg, (D,), dtype=jnp.float32)
    beta = 0.1 * jax.random.normal(kb, (D,), dtype=jnp.float32)

    # Stand-in for the wrapped `fn` sub-module: a plain linear projection.
    w_fn = jax.random.normal(kw, (D, D), dtype=jnp.float32) / math.sqrt(D)
    b_fn = 0.1 * jax.random.normal(kbias, (D,), dtype=jnp.float32)
    fn = lambda y: jnp.dot(y, w_fn, precision=_HIGHEST) + b_fn

    # Pure-JAX reference matching torch: fn(nn.LayerNorm(dim)(x)).
    mean = jnp.mean(x, axis=-1, keepdims=True)
    var = jnp.mean((x - mean) ** 2, axis=-1, keepdims=True)
    ref = fn((x - mean) * jax.lax.rsqrt(var + 1e-5) * gamma + beta)

    out_generic = pre_norm(x, gamma, beta, fn)           # LN kernel + jnp fn
    out_fused = pre_norm_linear(x, gamma, beta, w_fn, b_fn)  # fused LN+Linear
    jax.block_until_ready((out_generic, out_fused))

    assert out_generic.shape == ref.shape
    assert out_fused.shape == ref.shape
    err_g = float(jnp.max(jnp.abs(out_generic - ref)))
    err_f = float(jnp.max(jnp.abs(out_fused - ref)))
    assert jnp.allclose(out_generic, ref, atol=1e-3, rtol=1e-3), err_g
    assert jnp.allclose(out_fused, ref, atol=1e-3, rtol=1e-3), err_f
    print("KERNEL_OK")
</pallas_src>

<mosaic_0001>
module attributes {stable_mosaic.version = 11 : i64} {
  func.func @_layernorm_kernel(%arg0: i32, %arg1: memref<8x128xf32, #tpu.memory_space<vmem>>, %arg2: memref<1x128xf32, #tpu.memory_space<vmem>>, %arg3: memref<1x128xf32, #tpu.memory_space<vmem>>, %arg4: memref<8x128xf32, #tpu.memory_space<vmem>>) attributes {dimension_semantics = [#tpu.dimension_semantics<parallel>], iteration_bounds = array<i64: 2>, scalar_prefetch = 0 : i64, scratch_operands = 0 : i64, tpu.core_type = #tpu.core_type<tc>, window_params = [{transform_indices = @transform_0, window_bounds = array<i64: 8, 128>}, {pipeline_mode = #tpu.pipeline_mode<synchronous>, transform_indices = @transform_1, window_bounds = array<i64: 1, 128>}, {pipeline_mode = #tpu.pipeline_mode<synchronous>, transform_indices = @transform_2, window_bounds = array<i64: 1, 128>}, {transform_indices = @transform_3, window_bounds = array<i64: 8, 128>}]} {
    %c0 = arith.constant 0 : index
    %c0_0 = arith.constant 0 : index
    %0 = vector.load %arg1[%c0, %c0_0] : memref<8x128xf32, #tpu.memory_space<vmem>>, vector<8x128xf32>
    %cst = arith.constant 1.000000e+00 : f32
    %1 = vector.broadcast %cst : f32 to vector<128x1xf32>
    %cst_1 = arith.constant dense<0.000000e+00> : vector<8x1xf32>
    %2 = tpu.matmul %0, %1, %cst_1 {dimension_numbers = #tpu.dot_dimension_numbers<[1], [0], [0], [1], [0, 0, 1, 1], [], []>, precision = #tpu.contract_precision<fp32>} : vector<8x128xf32>, vector<128x1xf32>, vector<8x1xf32> -> vector<8x1xf32>
    %cst_2 = arith.constant 7.812500e-03 : f32
    %3 = vector.broadcast %cst_2 : f32 to vector<8x1xf32>
    %4 = arith.mulf %2, %3 : vector<8x1xf32>
    %5 = vector.broadcast %4 : vector<8x1xf32> to vector<8x128xf32>
    %6 = arith.subf %0, %5 : vector<8x128xf32>
    %7 = arith.mulf %6, %6 : vector<8x128xf32>
    %cst_3 = arith.constant dense<0.000000e+00> : vector<8x1xf32>
    %8 = tpu.matmul %7, %1, %cst_3 {dimension_numbers = #tpu.dot_dimension_numbers<[1], [0], [0], [1], [0, 0, 1, 1], [], []>, precision = #tpu.contract_precision<fp32>} : vector<8x128xf32>, vector<128x1xf32>, vector<8x1xf32> -> vector<8x1xf32>
    %cst_4 = arith.constant 7.812500e-03 : f32
    %9 = vector.broadcast %cst_4 : f32 to vector<8x1xf32>
    %10 = arith.mulf %8, %9 : vector<8x1xf32>
    %cst_5 = arith.constant 9.99999974E-6 : f32
    %11 = vector.broadcast %cst_5 : f32 to vector<8x1xf32>
    %12 = arith.addf %10, %11 : vector<8x1xf32>
    %13 = math.rsqrt %12 : vector<8x1xf32>
    %14 = vector.broadcast %13 : vector<8x1xf32> to vector<8x128xf32>
    %15 = arith.mulf %6, %14 : vector<8x128xf32>
    %c0_6 = arith.constant 0 : index
    %c0_7 = arith.constant 0 : index
    %16 = vector.load %arg2[%c0_6, %c0_7] : memref<1x128xf32, #tpu.memory_space<vmem>>, vector<1x128xf32>
    %17 = vector.broadcast %16 : vector<1x128xf32> to vector<8x128xf32>
    %18 = arith.mulf %15, %17 : vector<8x128xf32>
    %c0_8 = arith.constant 0 : index
    %c0_9 = arith.constant 0 : index
    %19 = vector.load %arg3[%c0_8, %c0_9] : memref<1x128xf32, #tpu.memory_space<vmem>>, vector<1x128xf32>
    %20 = vector.broadcast %19 : vector<1x128xf32> to vector<8x128xf32>
    %21 = arith.addf %18, %20 : vector<8x128xf32>
    %c0_10 = arith.constant 0 : index
    %c0_11 = arith.constant 0 : index
    %22 = vector.load %arg4[%c0_10, %c0_11] : memref<8x128xf32, #tpu.memory_space<vmem>>, vector<8x128xf32>
    tpu.vector_store %arg4[%c0_10, %c0_11], %21 {strides = array<i32>} : memref<8x128xf32, #tpu.memory_space<vmem>>, vector<8x128xf32>,
    return
  }
  func.func @transform_0(%arg0: i32) -> (i32, i32) {
    %c0_i32 = arith.constant 0 : i32
    %c0_i32_0 = arith.constant 0 : i32
    return %arg0, %c0_i32 : i32, i32
  }
  func.func @transform_1(%arg0: i32) -> (i32, i32) {
    %c0_i32 = arith.constant 0 : i32
    %c0_i32_0 = arith.constant 0 : i32
    %c0_i32_1 = arith.constant 0 : i32
    return %c0_i32, %c0_i32_0 : i32, i32
  }
  func.func @transform_2(%arg0: i32) -> (i32, i32) {
    %c0_i32 = arith.constant 0 : i32
    %c0_i32_0 = arith.constant 0 : i32
    %c0_i32_1 = arith.constant 0 : i32
    return %c0_i32, %c0_i32_0 : i32, i32
  }
  func.func @transform_3(%arg0: i32) -> (i32, i32) {
    %c0_i32 = arith.constant 0 : i32
    %c0_i32_0 = arith.constant 0 : i32
    return %arg0, %c0_i32 : i32, i32
  }
}

</mosaic_0001>

<llo_original>
// kernel: tpu_custom_call.1
$region0: #{tpu_custom_call.1}
  #allocation0 [shape = 'u32[]', space=smem, size = 0x4, offset = 0x4, fixed_abs, tag = 'smem constant byte address 0x4 - core index']
  #allocation1 [shape = 'u32[144,128]{1,0:T(1,128)}', space=vmem, size = 0x12000, scoped, tag = 'internal scratch']
  %s0 = inlined_call_operand.hbm [shape: f32[16,128], index: 0, kind: input, shape index: {}]
  %s1 = inlined_call_operand.vmem [shape: f32[1,128], index: 1, kind: input, shape index: {}]
  %s2 = inlined_call_operand.vmem [shape: f32[1,128], index: 2, kind: input, shape index: {}]
  %s3 = inlined_call_operand.hbm [shape: f32[16,128], index: 3, kind: output, shape index: {}]
  %s4 = sld [smem:[#allocation0]]
  $region49: #{tpu_custom_call.1} parent=0
    _
  %s6 = ssub.s32 1, %s4
  %s7 = scalar_select 0, %s6, %s4
  $region1: #{tpu_custom_call.1} parent=0
    #allocation2 [shape = 'u8[8192]{0}', space=vmem, size = 0x2000, scoped, tag = 'input window, operand 0']
    #allocation3 [shape = 's32[2]{0}', space=sflag, size = 0x8, scoped, tag = 'scoped memory for tpu_custom_call.1']
    #allocation4 [shape = 's32[2]{0}', space=sflag, size = 0x8, scoped, tag = 'scoped memory for tpu_custom_call.1']
    #allocation5 [shape = 'u8[8192]{0}', space=vmem, size = 0x2000, scoped, tag = 'output window, operand 0']
    %8 = vsyncpa [#allocation3], 0
    %s9 = scalar_lea.sflag [#allocation3], 1
    %10 = vsyncpa %s9, 0
    %11 = vsyncpa [#allocation4], 0
    %s12 = scalar_lea.sflag [#allocation4], 1
    %13 = vsyncpa %s12, 0
    loop: start=0, step=1, limit=4
    $region2: #{tpu_custom_call.1} parent=1 // loop_pre_header
      _
    $region3: #{tpu_custom_call.1} parent=1 // loop_header
      %s15 = sphi 0, %s19
      %p16 = scmp.ge.s32.totalorder %s15, 4
      %s25 = sphi 0, %s27
      %s28 = sphi 0, %s25
      %s29 = sphi 0, %s28
      %s45 = sphi 0, %s29
      %s49 = sphi 0, %s49
      %s51 = sphi 0, %s49
      %s52 = sphi 0, %s51
      %s66 = sphi 0, %s52
      %s70 = sphi 0, %s70
      %s72 = sphi 0, %s70
      %s73 = sphi 0, %s72
      %s87 = sphi 0, %s73
      %s93 = sphi 0, %s95
      %s96 = sphi 0, %s93
      %s97 = sphi 0, %s96
      %s113 = sphi 0, %s97
    $region4: #{tpu_custom_call.1} parent=1 // loop_header_branch
      %18 = sbr.rel (%p16) target = $region8
    $region5: #{tpu_custom_call.1} parent=1 // loop_body
      %s20 = ssub.s32 %s15, 1
      %s21 = ssub.s32 %s15, 2
      %s22 = sadd.s32 %s15, 1
      %s23 = ssub.s32 %s15, %s22
      %p24 = scmp.eq.s32.totalorder %s23, 0
      %s26 = sadd.s32 %s25, 1
      %s27 = scalar_select %p24, %s25, %s26
      %p30 = pneg %p24
      %p31 = scmp.eq.s32.totalorder %s15, 1
      %p32 = por %p30, %p31
      %p33 = scmp.ne.s32.totalorder %s25, %s28
      %p34 = scmp.eq.s32.totalorder %s15, 0
      %p35 = por %p33, %p34
      %p36 = scmp.ne.s32.totalorder %s25, %s28
      %p37 = scmp.eq.s32.totalorder %s20, 1
      %p38 = por %p36, %p37
      %p39 = scmp.ne.s32.totalorder %s28, %s29
      %p40 = scmp.eq.s32.totalorder %s20, 0
      %p41 = por %p39, %p40
      %p42 = scmp.ne.s32.totalorder %s28, %s29
      %p43 = scmp.eq.s32.totalorder %s21, 1
      %p44 = por %p42, %p43
      %p46 = scmp.ne.s32.totalorder %s29, %s45
      %p47 = scmp.eq.s32.totalorder %s21, 0
      %p48 = por %p46, %p47
      %s50 = sadd.s32 %s49, 1
      %p53 = scmp.eq.s32.totalorder %s15, 1
      %p54 = scmp.ne.s32.totalorder %s49, %s51
      %p55 = scmp.eq.s32.totalorder %s15, 0
      %p56 = por %p54, %p55
      %p57 = scmp.ne.s32.totalorder %s49, %s51
      %p58 = scmp.eq.s32.totalorder %s20, 1
      %p59 = por %p57, %p58
      %p60 = scmp.ne.s32.totalorder %s51, %s52
      %p61 = scmp.eq.s32.totalorder %s20, 0
      %p62 = por %p60, %p61
      %p63 = scmp.ne.s32.totalorder %s51, %s52
      %p64 = scmp.eq.s32.totalorder %s21, 1
      %p65 = por %p63, %p64
      %p67 = scmp.ne.s32.totalorder %s52, %s66
      %p68 = scmp.eq.s32.totalorder %s21, 0
      %p69 = por %p67, %p68
      %s71 = sadd.s32 %s70, 1
      %p74 = scmp.eq.s32.totalorder %s15, 1
      %p75 = scmp.ne.s32.totalorder %s70, %s72
      %p76 = scmp.eq.s32.totalorder %s15, 0
      %p77 = por %p75, %p76
      %p78 = scmp.ne.s32.totalorder %s70, %s72
      %p79 = scmp.eq.s32.totalorder %s20, 1
      %p80 = por %p78, %p79
      %p81 = scmp.ne.s32.totalorder %s72, %s73
      %p82 = scmp.eq.s32.totalorder %s20, 0
      %p83 = por %p81, %p82
      %p84 = scmp.ne.s32.totalorder %s72, %s73
      %p85 = scmp.eq.s32.totalorder %s21, 1
      %p86 = por %p84, %p85
      %p88 = scmp.ne.s32.totalorder %s73, %s87
      %p89 = scmp.eq.s32.totalorder %s21, 0
      %p90 = por %p88, %p89
      %s91 = ssub.s32 %s15, %s22
      %p92 = scmp.eq.s32.totalorder %s91, 0
      %s94 = sadd.s32 %s93, 1
      %s95 = scalar_select %p92, %s93, %s94
      %p98 = pneg %p92
      %p99 = scmp.eq.s32.totalorder %s15, 1
      %p100 = por %p98, %p99
      %p101 = scmp.ne.s32.totalorder %s93, %s96
      %p102 = scmp.eq.s32.totalorder %s15, 0
      %p103 = por %p101, %p102
      %p104 = scmp.ne.s32.totalorder %s93, %s96
      %p105 = scmp.eq.s32.totalorder %s20, 1
      %p106 = por %p104, %p105
      %p107 = scmp.ne.s32.totalorder %s96, %s97
      %p108 = scmp.eq.s32.totalorder %s20, 0
      %p109 = por %p107, %p108
      %p110 = scmp.ne.s32.totalorder %s96, %s97
      %p111 = scmp.eq.s32.totalorder %s21, 1
      %p112 = por %p110, %p111
      %p114 = scmp.ne.s32.totalorder %s97, %s113
      %p115 = scmp.eq.s32.totalorder %s21, 0
      %p116 = por %p114, %p115
      %p117 = scmp.le.s32.totalorder 1, %s15
      %p118 = scmp.lt.s32.totalorder %s15, 3
      %p119 = pnand %p117, %p118
      %p120 = pneg %p119
      // Predicated region
      $region9: #{tpu_custom_call.1} parent=5 // pred_check
        _
      $region10: #{tpu_custom_call.1} parent=5 // pred_check_branch
        %122 = sbr.rel (%p119) target = $region12
      $region11: #{tpu_custom_call.1} parent=5 // pred_region
        %s123 = ssub.s32 %s15, 1
        // Predicated region
        $region13: #{tpu_custom_call.1} parent=11 // pred_check
          %p124 = pneg %p62
        $region14: #{tpu_custom_call.1} parent=11 // pred_check_branch
          %126 = sbr.rel (%p124) target = $region16
        $region15: #{tpu_custom_call.1} parent=11 // pred_region
          _
        $region16: #{tpu_custom_call.1} parent=11 // pred_fallthru
          _
        // Predicated region
        $region17: #{tpu_custom_call.1} parent=11 // pred_check
          %p127 = pneg %p83
        $region18: #{tpu_custom_call.1} parent=11 // pred_check_branch
          %129 = sbr.rel (%p127) target = $region20
        $region19: #{tpu_custom_call.1} parent=11 // pred_region
          _
        $region20: #{tpu_custom_call.1} parent=11 // pred_fallthru
          _
      $region12: #{tpu_custom_call.1} parent=5 // pred_fallthru
        _
      %p130 = scmp.lt.s32.totalorder %s15, 2
      // Predicated region
      $region21: #{tpu_custom_call.1} parent=5 // pred_check
        %p131 = pneg %p130
      $region22: #{tpu_custom_call.1} parent=5 // pred_check_branch
        %133 = sbr.rel (%p131) target = $region24
      $region23: #{tpu_custom_call.1} parent=5 // pred_region
        // Predicated region
        $region25: #{tpu_custom_call.1} parent=23 // pred_check
          %p134 = pneg %p35
        $region26: #{tpu_custom_call.1} parent=23 // pred_check_branch
          %136 = sbr.rel (%p134) target = $region28
        $region27: #{tpu_custom_call.1} parent=23 // pred_region
          %s137 = sand.u32 %s25, 1
          %s138 = scalar_lea.sflag [#allocation3], %s137
          %s139 = sand.u32 %s25, 1
          %s140 = smul.addr %s139, 8
          %s141 = scalar_lea.vmem [#allocation2], %s140
          %s143 = ssub.s32 128, 128
          %144 = vsyncadd %s138, %s143
          %s145 = smul.addr %s15, 128
          %s146 = scalar_lea.hbm %s0, %s145
          %s148 = sshll.u32 %s141, 4
          %s149 = int_to_ptr.vmem [resolvable:$true] %s148
          %151 = dma.hbm_to_vmem [thread:$0]  %s146, 128, %s149, %s138
        $region28: #{tpu_custom_call.1} parent=23 // pred_fallthru
          _
      $region24: #{tpu_custom_call.1} parent=5 // pred_fallthru
        _
      %p152 = scmp.le.s32.totalorder 1, %s15
      %p153 = scmp.lt.s32.totalorder %s15, 3
      %p154 = pnand %p152, %p153
      %p155 = pneg %p154
      // Predicated region
      $region29: #{tpu_custom_call.1} parent=5 // pred_check
        _
      $region30: #{tpu_custom_call.1} parent=5 // pred_check_branch
        %157 = sbr.rel (%p154) target = $region32
      $region31: #{tpu_custom_call.1} parent=5 // pred_region
        %s158 = ssub.s32 %s15, 1
        %s159 = sand.u32 %s28, 1
        %s160 = scalar_lea.sflag [#allocation3], %s159
        %s161 = sand.u32 %s28, 1
        %s162 = smul.addr %s161, 8
        %s163 = scalar_lea.vmem [#allocation2], %s162
        // Predicated region
        $region33: #{tpu_custom_call.1} parent=31 // pred_check
          %p164 = pneg %p41
        $region34: #{tpu_custom_call.1} parent=31 // pred_check_branch
          %166 = sbr.rel (%p164) target = $region36
        $region35: #{tpu_custom_call.1} parent=31 // pred_region
          %167 = dma.done %s160, 128
        $region36: #{tpu_custom_call.1} parent=31 // pred_fallthru
          _
        %s168 = sand.u32 %s28, 1
        %s169 = scalar_lea.sflag [#allocation3], %s168
        %s170 = sand.u32 %s28, 1
        %s171 = smul.addr %s170, 8
        %s172 = scalar_lea.vmem [#allocation2], %s171
        %p173 = pneg %p41
        %p174 = pneg %p38
        %p175 = pneg %p62
        %p176 = pneg %p59
        %p177 = pneg %p83
        %p178 = pneg %p80
        %p179 = pneg %p109
        %p180 = pneg %p106
        %s181 = sand.u32 %s96, 1
        %s182 = scalar_lea.sflag [#allocation4], %s181
        %s183 = sand.u32 %s96, 1
        %s184 = smul.addr %s183, 8
        %s185 = scalar_lea.vmem [#allocation5], %s184
        %v186 = vld [vmem:[%s163] sm:$0xff]
        %187 = vmatprep.subr.mxu0 0.0
        %188 = vmatpush1.msra.mxu0 1.0
        %189 = vmatprep.subr.mxu0 0.0
        %190 = vmatpush1.msra.mxu0 1.0
        %191 = vmatprep.subr.mxu0 0.0
        %192 = vmatpush1.msra.mxu0 1.0
        %193 = vmatprep.subr.mxu0 0.0
        %194 = vmatpush1.msra.mxu0 1.0
        %195 = vmatprep.subr.mxu0 0.0
        %196 = vmatpush1.msra.mxu0 1.0
        %197 = vmatprep.subr.mxu0 0.0
        %198 = vmatpush1.msra.mxu0 1.0
        %199 = vmatprep.subr.mxu0 0.0
        %200 = vmatpush1.msra.mxu0 1.0
        %201 = vmatprep.subr.mxu0 0.0
        %202 = vmatpush1.msra.mxu0 1.0
        %203 = vmatprep.subr.mxu0 0.0
        %204 = vmatpush1.msra.mxu0 1.0
        %205 = vmatprep.subr.mxu0 0.0
        %206 = vmatpush1.msra.mxu0 1.0
        %207 = vmatprep.subr.mxu0 0.0
        %208 = vmatpush1.msra.mxu0 1.0
        %209 = vmatprep.subr.mxu0 0.0
        %210 = vmatpush1.msra.mxu0 1.0
        %211 = vmatprep.subr.mxu0 0.0
        %212 = vmatpush1.msra.mxu0 1.0
        %213 = vmatprep.subr.mxu0 0.0
        %214 = vmatpush1.msra.mxu0 1.0
        %215 = vmatprep.subr.mxu0 0.0
        %216 = vmatpush1.msra.mxu0 1.0
        %217 = vmatprep.subr.mxu0 0.0
        %218 = vmatpush1.msra.mxu0 1.0
        %219 = vmatprep.subr.mxu0 0.0
        %220 = vmatpush1.msra.mxu0 0.0
        %221 = vmatprep.subr.mxu0 0.0
        %222 = vmatpush1.msra.mxu0 0.0
        %223 = vmatprep.subr.mxu0 0.0
        %224 = vmatpush1.msra.mxu0 0.0
        %225 = vmatprep.subr.mxu0 0.0
        %226 = vmatpush1.msra.mxu0 0.0
        %227 = vmatprep.subr.mxu0 0.0
        %228 = vmatpush1.msra.mxu0 0.0
        %229 = vmatprep.subr.mxu0 0.0
        %230 = vmatpush1.msra.mxu0 0.0
        %231 = vmatprep.subr.mxu0 0.0
        %232 = vmatpush1.msra.mxu0 0.0
        %233 = vmatprep.subr.mxu0 0.0
        %234 = vmatpush1.msra.mxu0 0.0
        %235 = vmatprep.subr.mxu0 0.0
        %236 = vmatpush1.msra.mxu0 0.0
        %237 = vmatprep.subr.mxu0 0.0
        %238 = vmatpush1.msra.mxu0 0.0
        %239 = vmatprep.subr.mxu0 0.0
        %240 = vmatpush1.msra.mxu0 0.0
        %241 = vmatprep.subr.mxu0 0.0
        %242 = vmatpush1.msra.mxu0 0.0
        %243 = vmatprep.subr.mxu0 0.0
        %244 = vmatpush1.msra.mxu0 0.0
        %245 = vmatprep.subr.mxu0 0.0
        %246 = vmatpush1.msra.mxu0 0.0
        %247 = vmatprep.subr.mxu0 0.0
        %248 = vmatpush1.msra.mxu0 0.0
        %249 = vmatprep.subr.mxu0 0.0
        %250 = vmatpush1.msra.mxu0 0.0
        %251 = vmatprep.mubr.f32.mxu0 0.0
        %v252 = vand.u32 %v186, 4294901760
        %v253 = vsub.f32 %v186, %v252
        %v254 = vand.u32 %v253, 4294901760
        %v255 = vsub.f32 %v253, %v254
        %v256 = vand.u32 %v255, 4294901760
        %257 = vmatmul.mubr.f32.gmra.mrb[0].mxu0 %v256
        %v258 = vpop.f32.mrb[0].mxu0
        %v259 = vadd.f32 0.0, %v258
        %v260 = vpop.f32.mrb[0].mxu0
        %261 = vdwg.mxu0
        %262 = vmatprep.subr.mxu0 0.0
        %263 = vmatpush1.msra.mxu0 0.0
        %264 = vmatprep.subr.mxu0 0.0
        %265 = vmatpush1.msra.mxu0 0.0
        %266 = vmatprep.subr.mxu0 0.0
        %267 = vmatpush1.msra.mxu0 0.0
        %268 = vmatprep.subr.mxu0 0.0
        %269 = vmatpush1.msra.mxu0 0.0
        %270 = vmatprep.subr.mxu0 0.0
        %271 = vmatpush1.msra.mxu0 0.0
        %272 = vmatprep.subr.mxu0 0.0
        %273 = vmatpush1.msra.mxu0 0.0
        %274 = vmatprep.subr.mxu0 0.0
        %275 = vmatpush1.msra.mxu0 0.0
        %276 = vmatprep.subr.mxu0 0.0
        %277 = vmatpush1.msra.mxu0 0.0
        %278 = vmatprep.subr.mxu0 0.0
        %279 = vmatpush1.msra.mxu0 0.0
        %280 = vmatprep.subr.mxu0 0.0
        %281 = vmatpush1.msra.mxu0 0.0
        %282 = vmatprep.subr.mxu0 0.0
        %283 = vmatpush1.msra.mxu0 0.0
        %284 = vmatprep.subr.mxu0 0.0
        %285 = vmatpush1.msra.mxu0 0.0
        %286 = vmatprep.subr.mxu0 0.0
        %287 = vmatpush1.msra.mxu0 0.0
        %288 = vmatprep.subr.mxu0 0.0
        %289 = vmatpush1.msra.mxu0 0.0
        %290 = vmatprep.subr.mxu0 0.0
        %291 = vmatpush1.msra.mxu0 0.0
        %292 = vmatprep.subr.mxu0 0.0
        %293 = vmatpush1.msra.mxu0 0.0
        %294 = vmatprep.subr.mxu0 0.0
        %295 = vmatpush1.msra.mxu0 0.0
        %296 = vmatprep.subr.mxu0 0.0
        %297 = vmatpush1.msra.mxu0 0.0
        %298 = vmatprep.subr.mxu0 0.0
        %299 = vmatpush1.msra.mxu0 0.0
        %300 = vmatprep.subr.mxu0 0.0
        %301 = vmatpush1.msra.mxu0 0.0
        %302 = vmatprep.subr.mxu0 0.0
        %303 = vmatpush1.msra.mxu0 0.0
        %304 = vmatprep.subr.mxu0 0.0
        %305 = vmatpush1.msra.mxu0 0.0
        %306 = vmatprep.subr.mxu0 0.0
        %307 = vmatpush1.msra.mxu0 0.0
        %308 = vmatprep.subr.mxu0 0.0
        %309 = vmatpush1.msra.mxu0 0.0
        %310 = vmatprep.subr.mxu0 0.0
        %311 = vmatpush1.msra.mxu0 0.0
        %312 = vmatprep.subr.mxu0 0.0
        %313 = vmatpush1.msra.mxu0 0.0
        %314 = vmatprep.subr.mxu0 0.0
        %315 = vmatpush1.msra.mxu0 0.0
        %316 = vmatprep.subr.mxu0 0.0
        %317 = vmatpush1.msra.mxu0 0.0
        %318 = vmatprep.subr.mxu0 0.0
        %319 = vmatpush1.msra.mxu0 0.0
        %320 = vmatprep.subr.mxu0 0.0
        %321 = vmatpush1.msra.mxu0 0.0
        %322 = vmatprep.subr.mxu0 0.0
        %323 = vmatpush1.msra.mxu0 0.0
        %324 = vmatprep.subr.mxu0 0.0
        %325 = vmatpush1.msra.mxu0 0.0
        %326 = vmatprep.mubr.f32.mxu0 0.0
        %v327 = vand.u32 %v186, 4294901760
        %328 = vmatmul.mubr.f32.gmra.mrb[0].mxu0 %v327
        %v329 = vpop.f32.mrb[0].mxu0
        %v330 = vadd.f32 %v259, %v329
        %v331 = vpop.f32.mrb[0].mxu0
        %332 = vdwg.mxu0
        %333 = vmatprep.subr.mxu0 0.0
        %334 = vmatpush1.msra.mxu0 0.0
        %335 = vmatprep.subr.mxu0 0.0
        %336 = vmatpush1.msra.mxu0 0.0
        %337 = vmatprep.subr.mxu0 0.0
        %338 = vmatpush1.msra.mxu0 0.0
        %339 = vmatprep.subr.mxu0 0.0
        %340 = vmatpush1.msra.mxu0 0.0
        %341 = vmatprep.subr.mxu0 0.0
        %342 = vmatpush1.msra.mxu0 0.0
        %343 = vmatprep.subr.mxu0 0.0
        %344 = vmatpush1.msra.mxu0 0.0
        %345 = vmatprep.subr.mxu0 0.0
        %346 = vmatpush1.msra.mxu0 0.0
        %347 = vmatprep.subr.mxu0 0.0
        %348 = vmatpush1.msra.mxu0 0.0
        %349 = vmatprep.subr.mxu0 0.0
        %350 = vmatpush1.msra.mxu0 0.0
        %351 = vmatprep.subr.mxu0 0.0
        %352 = vmatpush1.msra.mxu0 0.0
        %353 = vmatprep.subr.mxu0 0.0
        %354 = vmatpush1.msra.mxu0 0.0
        %355 = vmatprep.subr.mxu0 0.0
        %356 = vmatpush1.msra.mxu0 0.0
        %357 = vmatprep.subr.mxu0 0.0
        %358 = vmatpush1.msra.mxu0 0.0
        %359 = vmatprep.subr.mxu0 0.0
        %360 = vmatpush1.msra.mxu0 0.0
        %361 = vmatprep.subr.mxu0 0.0
        %362 = vmatpush1.msra.mxu0 0.0
        %363 = vmatprep.subr.mxu0 0.0
        %364 = vmatpush1.msra.mxu0 0.0
        %365 = vmatprep.subr.mxu0 0.0
        %366 = vmatpush1.msra.mxu0 0.0
        %367 = vmatprep.subr.mxu0 0.0
        %368 = vmatpush1.msra.mxu0 0.0
        %369 = vmatprep.subr.mxu0 0.0
        %370 = vmatpush1.msra.mxu0 0.0
        %371 = vmatprep.subr.mxu0 0.0
        %372 = vmatpush1.msra.mxu0 0.0
        %373 = vmatprep.subr.mxu0 0.0
        %374 = vmatpush1.msra.mxu0 0.0
        %375 = vmatprep.subr.mxu0 0.0
        %376 = vmatpush1.msra.mxu0 0.0
        %377 = vmatprep.subr.mxu0 0.0
        %378 = vmatpush1.msra.mxu0 0.0
        %379 = vmatprep.subr.mxu0 0.0
        %380 = vmatpush1.msra.mxu0 0.0
        %381 = vmatprep.subr.mxu0 0.0
        %382 = vmatpush1.msra.mxu0 0.0
        %383 = vmatprep.subr.mxu0 0.0
        %384 = vmatpush1.msra.mxu0 0.0
        %385 = vmatprep.subr.mxu0 0.0
        %386 = vmatpush1.msra.mxu0 0.0
        %387 = vmatprep.subr.mxu0 0.0
        %388 = vmatpush1.msra.mxu0 0.0
        %389 = vmatprep.subr.mxu0 0.0
        %390 = vmatpush1.msra.mxu0 0.0
        %391 = vmatprep.subr.mxu0 0.0
        %392 = vmatpush1.msra.mxu0 0.0
        %393 = vmatprep.subr.mxu0 0.0
        %394 = vmatpush1.msra.mxu0 0.0
        %395 = vmatprep.subr.mxu0 0.0
        %396 = vmatpush1.msra.mxu0 0.0
        %397 = vmatprep.mubr.f32.mxu0 0.0
        %v398 = vand.u32 %v186, 4294901760
        %v399 = vsub.f32 %v186, %v398
        %400 = vmatmul.mubr.f32.gmra.mrb[0].mxu0 %v399
        %v401 = vpop.f32.mrb[0].mxu0
        %v402 = vadd.f32 %v330, %v401
        %v403 = vpop.f32.mrb[0].mxu0
        %404 = vdwg.mxu0
        %405 = vmatprep.subr.mxu0 0.0
        %406 = vmatpush1.msra.mxu0 1.0
        %407 = vmatprep.subr.mxu0 0.0
        %408 = vmatpush1.msra.mxu0 1.0
        %409 = vmatprep.subr.mxu0 0.0
        %410 = vmatpush1.msra.mxu0 1.0
        %411 = vmatprep.subr.mxu0 0.0
        %412 = vmatpush1.msra.mxu0 1.0
        %413 = vmatprep.subr.mxu0 0.0
        %414 = vmatpush1.msra.mxu0 1.0
        %415 = vmatprep.subr.mxu0 0.0
        %416 = vmatpush1.msra.mxu0 1.0
        %417 = vmatprep.subr.mxu0 0.0
        %418 = vmatpush1.msra.mxu0 1.0
        %419 = vmatprep.subr.mxu0 0.0
        %420 = vmatpush1.msra.mxu0 1.0
        %421 = vmatprep.subr.mxu0 0.0
        %422 = vmatpush1.msra.mxu0 1.0
        %423 = vmatprep.subr.mxu0 0.0
        %424 = vmatpush1.msra.mxu0 1.0
        %425 = vmatprep.subr.mxu0 0.0
        %426 = vmatpush1.msra.mxu0 1.0
        %427 = vmatprep.subr.mxu0 0.0
        %428 = vmatpush1.msra.mxu0 1.0
        %429 = vmatprep.subr.mxu0 0.0
        %430 = vmatpush1.msra.mxu0 1.0
        %431 = vmatprep.subr.mxu0 0.0
        %432 = vmatpush1.msra.mxu0 1.0
        %433 = vmatprep.subr.mxu0 0.0
        %434 = vmatpush1.msra.mxu0 1.0
        %435 = vmatprep.subr.mxu0 0.0
        %436 = vmatpush1.msra.mxu0 1.0
        %437 = vmatprep.subr.mxu0 0.0
        %438 = vmatpush1.msra.mxu0 0.0
        %439 = vmatprep.subr.mxu0 0.0
        %440 = vmatpush1.msra.mxu0 0.0
        %441 = vmatprep.subr.mxu0 0.0
        %442 = vmatpush1.msra.mxu0 0.0
        %443 = vmatprep.subr.mxu0 0.0
        %444 = vmatpush1.msra.mxu0 0.0
        %445 = vmatprep.subr.mxu0 0.0
        %446 = vmatpush1.msra.mxu0 0.0
        %447 = vmatprep.subr.mxu0 0.0
        %448 = vmatpush1.msra.mxu0 0.0
        %449 = vmatprep.subr.mxu0 0.0
        %450 = vmatpush1.msra.mxu0 0.0
        %451 = vmatprep.subr.mxu0 0.0
        %452 = vmatpush1.msra.mxu0 0.0
        %453 = vmatprep.subr.mxu0 0.0
        %454 = vmatpush1.msra.mxu0 0.0
        %455 = vmatprep.subr.mxu0 0.0
        %456 = vmatpush1.msra.mxu0 0.0
        %457 = vmatprep.subr.mxu0 0.0
        %458 = vmatpush1.msra.mxu0 0.0
        %459 = vmatprep.subr.mxu0 0.0
        %460 = vmatpush1.msra.mxu0 0.0
        %461 = vmatprep.subr.mxu0 0.0
        %462 = vmatpush1.msra.mxu0 0.0
        %463 = vmatprep.subr.mxu0 0.0
        %464 = vmatpush1.msra.mxu0 0.0
        %465 = vmatprep.subr.mxu0 0.0
        %466 = vmatpush1.msra.mxu0 0.0
        %467 = vmatprep.subr.mxu0 0.0
        %468 = vmatpush1.msra.mxu0 0.0
        %469 = vmatprep.mubr.f32.mxu0 0.0
        %v470 = vand.u32 %v186, 4294901760
        %v471 = vsub.f32 %v186, %v470
        %v472 = vand.u32 %v471, 4294901760
        %473 = vmatmul.mubr.f32.gmra.mrb[0].mxu0 %v472
        %v474 = vpop.f32.mrb[0].mxu0
        %v475 = vadd.f32 %v402, %v474
        %v476 = vpop.f32.mrb[0].mxu0
        %477 = vdwg.mxu0
        %478 = vmatprep.subr.mxu0 0.0
        %479 = vmatpush1.msra.mxu0 0.0
        %480 = vmatprep.subr.mxu0 0.0
        %481 = vmatpush1.msra.mxu0 0.0
        %482 = vmatprep.subr.mxu0 0.0
        %483 = vmatpush1.msra.mxu0 0.0
        %484 = vmatprep.subr.mxu0 0.0
        %485 = vmatpush1.msra.mxu0 0.0
        %486 = vmatprep.subr.mxu0 0.0
        %487 = vmatpush1.msra.mxu0 0.0
        %488 = vmatprep.subr.mxu0 0.0
        %489 = vmatpush1.msra.mxu0 0.0
        %490 = vmatprep.subr.mxu0 0.0
        %491 = vmatpush1.msra.mxu0 0.0
        %492 = vmatprep.subr.mxu0 0.0
        %493 = vmatpush1.msra.mxu0 0.0
        %494 = vmatprep.subr.mxu0 0.0
        %495 = vmatpush1.msra.mxu0 0.0
        %496 = vmatprep.subr.mxu0 0.0
        %497 = vmatpush1.msra.mxu0 0.0
        %498 = vmatprep.subr.mxu0 0.0
        %499 = vmatpush1.msra.mxu0 0.0
        %500 = vmatprep.subr.mxu0 0.0
        %501 = vmatpush1.msra.mxu0 0.0
        %502 = vmatprep.subr.mxu0 0.0
        %503 = vmatpush1.msra.mxu0 0.0
        %504 = vmatprep.subr.mxu0 0.0
        %505 = vmatpush1.msra.mxu0 0.0
        %506 = vmatprep.subr.mxu0 0.0
        %507 = vmatpush1.msra.mxu0 0.0
        %508 = vmatprep.subr.mxu0 0.0
        %509 = vmatpush1.msra.mxu0 0.0
        %510 = vmatprep.subr.mxu0 0.0
        %511 = vmatpush1.msra.mxu0 0.0
        %512 = vmatprep.subr.mxu0 0.0
        %513 = vmatpush1.msra.mxu0 0.0
        %514 = vmatprep.subr.mxu0 0.0
        %515 = vmatpush1.msra.mxu0 0.0
        %516 = vmatprep.subr.mxu0 0.0
        %517 = vmatpush1.msra.mxu0 0.0
        %518 = vmatprep.subr.mxu0 0.0
        %519 = vmatpush1.msra.mxu0 0.0
        %520 = vmatprep.subr.mxu0 0.0
        %521 = vmatpush1.msra.mxu0 0.0
        %522 = vmatprep.subr.mxu0 0.0
        %523 = vmatpush1.msra.mxu0 0.0
        %524 = vmatprep.subr.mxu0 0.0
        %525 = vmatpush1.msra.mxu0 0.0
        %526 = vmatprep.subr.mxu0 0.0
        %527 = vmatpush1.msra.mxu0 0.0
        %528 = vmatprep.subr.mxu0 0.0
        %529 = vmatpush1.msra.mxu0 0.0
        %530 = vmatprep.subr.mxu0 0.0
        %531 = vmatpush1.msra.mxu0 0.0
        %532 = vmatprep.subr.mxu0 0.0
        %533 = vmatpush1.msra.mxu0 0.0
        %534 = vmatprep.subr.mxu0 0.0
        %535 = vmatpush1.msra.mxu0 0.0
        %536 = vmatprep.subr.mxu0 0.0
        %537 = vmatpush1.msra.mxu0 0.0
        %538 = vmatprep.subr.mxu0 0.0
        %539 = vmatpush1.msra.mxu0 0.0
        %540 = vmatprep.subr.mxu0 0.0
        %541 = vmatpush1.msra.mxu0 0.0
        %542 = vmatprep.mubr.f32.mxu0 0.0
        %v543 = vand.u32 %v186, 4294901760
        %544 = vmatmul.mubr.f32.gmra.mrb[0].mxu0 %v543
        %v545 = vpop.f32.mrb[0].mxu0
        %v546 = vadd.f32 %v475, %v545
        %v547 = vpop.f32.mrb[0].mxu0
        %548 = vdwg.mxu0
        %549 = vmatprep.subr.mxu0 0.0
        %550 = vmatpush1.msra.mxu0 1.0
        %551 = vmatprep.subr.mxu0 0.0
        %552 = vmatpush1.msra.mxu0 1.0
        %553 = vmatprep.subr.mxu0 0.0
        %554 = vmatpush1.msra.mxu0 1.0
        %555 = vmatprep.subr.mxu0 0.0
        %556 = vmatpush1.msra.mxu0 1.0
        %557 = vmatprep.subr.mxu0 0.0
        %558 = vmatpush1.msra.mxu0 1.0
        %559 = vmatprep.subr.mxu0 0.0
        %560 = vmatpush1.msra.mxu0 1.0
        %561 = vmatprep.subr.mxu0 0.0
        %562 = vmatpush1.msra.mxu0 1.0
        %563 = vmatprep.subr.mxu0 0.0
        %564 = vmatpush1.msra.mxu0 1.0
        %565 = vmatprep.subr.mxu0 0.0
        %566 = vmatpush1.msra.mxu0 1.0
        %567 = vmatprep.subr.mxu0 0.0
        %568 = vmatpush1.msra.mxu0 1.0
        %569 = vmatprep.subr.mxu0 0.0
        %570 = vmatpush1.msra.mxu0 1.0
        %571 = vmatprep.subr.mxu0 0.0
        %572 = vmatpush1.msra.mxu0 1.0
        %573 = vmatprep.subr.mxu0 0.0
        %574 = vmatpush1.msra.mxu0 1.0
        %575 = vmatprep.subr.mxu0 0.0
        %576 = vmatpush1.msra.mxu0 1.0
        %577 = vmatprep.subr.mxu0 0.0
        %578 = vmatpush1.msra.mxu0 1.0
        %579 = vmatprep.subr.mxu0 0.0
        %580 = vmatpush1.msra.mxu0 1.0
        %581 = vmatprep.subr.mxu0 0.0
        %582 = vmatpush1.msra.mxu0 0.0
        %583 = vmatprep.subr.mxu0 0.0
        %584 = vmatpush1.msra.mxu0 0.0
        %585 = vmatprep.subr.mxu0 0.0
        %586 = vmatpush1.msra.mxu0 0.0
        %587 = vmatprep.subr.mxu0 0.0
        %588 = vmatpush1.msra.mxu0 0.0
        %589 = vmatprep.subr.mxu0 0.0
        %590 = vmatpush1.msra.mxu0 0.0
        %591 = vmatprep.subr.mxu0 0.0
        %592 = vmatpush1.msra.mxu0 0.0
        %593 = vmatprep.subr.mxu0 0.0
        %594 = vmatpush1.msra.mxu0 0.0
        %595 = vmatprep.subr.mxu0 0.0
        %596 = vmatpush1.msra.mxu0 0.0
        %597 = vmatprep.subr.mxu0 0.0
        %598 = vmatpush1.msra.mxu0 0.0
        %599 = vmatprep.subr.mxu0 0.0
        %600 = vmatpush1.msra.mxu0 0.0
        %601 = vmatprep.subr.mxu0 0.0
        %602 = vmatpush1.msra.mxu0 0.0
        %603 = vmatprep.subr.mxu0 0.0
        %604 = vmatpush1.msra.mxu0 0.0
        %605 = vmatprep.subr.mxu0 0.0
        %606 = vmatpush1.msra.mxu0 0.0
        %607 = vmatprep.subr.mxu0 0.0
        %608 = vmatpush1.msra.mxu0 0.0
        %609 = vmatprep.subr.mxu0 0.0
        %610 = vmatpush1.msra.mxu0 0.0
        %611 = vmatprep.subr.mxu0 0.0
        %612 = vmatpush1.msra.mxu0 0.0
        %613 = vmatprep.mubr.f32.mxu0 0.0
        %v614 = vand.u32 %v186, 4294901760
        %615 = vmatmul.mubr.f32.gmra.mrb[0].mxu0 %v614
        %v616 = vpop.f32.mrb[0].mxu0
        %v617 = vadd.f32 %v546, %v616
        %v618 = vpop.f32.mrb[0].mxu0
        %619 = vdwg.mxu0
        %v620 = vmul.f32 %v617, 0.0078125
        %622 = vset.pattern.permute.xlu0 0
        %623 = vperm.xlu0 %622, %v620
        %v624 = vpop.permute.xlu0 %623
        %v626 = vsub.f32 %v186, %v624
        %v627 = vmul.f32 %v626, %v626
        %628 = vmatprep.subr.mxu0 0.0
        %629 = vmatpush1.msra.mxu0 1.0
        %630 = vmatprep.subr.mxu0 0.0
        %631 = vmatpush1.msra.mxu0 1.0
        %632 = vmatprep.subr.mxu0 0.0
        %633 = vmatpush1.msra.mxu0 1.0
        %634 = vmatprep.subr.mxu0 0.0
        %635 = vmatpush1.msra.mxu0 1.0
        %636 = vmatprep.subr.mxu0 0.0
        %637 = vmatpush1.msra.mxu0 1.0
        %638 = vmatprep.subr.mxu0 0.0
        %639 = vmatpush1.msra.mxu0 1.0
        %640 = vmatprep.subr.mxu0 0.0
        %641 = vmatpush1.msra.mxu0 1.0
        %642 = vmatprep.subr.mxu0 0.0
        %643 = vmatpush1.msra.mxu0 1.0
        %644 = vmatprep.subr.mxu0 0.0
        %645 = vmatpush1.msra.mxu0 1.0
        %646 = vmatprep.subr.mxu0 0.0
        %647 = vmatpush1.msra.mxu0 1.0
        %648 = vmatprep.subr.mxu0 0.0
        %649 = vmatpush1.msra.mxu0 1.0
        %650 = vmatprep.subr.mxu0 0.0
        %651 = vmatpush1.msra.mxu0 1.0
        %652 = vmatprep.subr.mxu0 0.0
        %653 = vmatpush1.msra.mxu0 1.0
        %654 = vmatprep.subr.mxu0 0.0
        %655 = vmatpush1.msra.mxu0 1.0
        %656 = vmatprep.subr.mxu0 0.0
        %657 = vmatpush1.msra.mxu0 1.0
        %658 = vmatprep.subr.mxu0 0.0
        %659 = vmatpush1.msra.mxu0 1.0
        %660 = vmatprep.subr.mxu0 0.0
        %661 = vmatpush1.msra.mxu0 0.0
        %662 = vmatprep.subr.mxu0 0.0
        %663 = vmatpush1.msra.mxu0 0.0
        %664 = vmatprep.subr.mxu0 0.0
        %665 = vmatpush1.msra.mxu0 0.0
        %666 = vmatprep.subr.mxu0 0.0
        %667 = vmatpush1.msra.mxu0 0.0
        %668 = vmatprep.subr.mxu0 0.0
        %669 = vmatpush1.msra.mxu0 0.0
        %670 = vmatprep.subr.mxu0 0.0
        %671 = vmatpush1.msra.mxu0 0.0
        %672 = vmatprep.subr.mxu0 0.0
        %673 = vmatpush1.msra.mxu0 0.0
        %674 = vmatprep.subr.mxu0 0.0
        %675 = vmatpush1.msra.mxu0 0.0
        %676 = vmatprep.subr.mxu0 0.0
        %677 = vmatpush1.msra.mxu0 0.0
        %678 = vmatprep.subr.mxu0 0.0
        %679 = vmatpush1.msra.mxu0 0.0
        %680 = vmatprep.subr.mxu0 0.0
        %681 = vmatpush1.msra.mxu0 0.0
        %682 = vmatprep.subr.mxu0 0.0
        %683 = vmatpush1.msra.mxu0 0.0
        %684 = vmatprep.subr.mxu0 0.0
        %685 = vmatpush1.msra.mxu0 0.0
        %686 = vmatprep.subr.mxu0 0.0
        %687 = vmatpush1.msra.mxu0 0.0
        %688 = vmatprep.subr.mxu0 0.0
        %689 = vmatpush1.msra.mxu0 0.0
        %690 = vmatprep.subr.mxu0 0.0
        %691 = vmatpush1.msra.mxu0 0.0
        %692 = vmatprep.mubr.f32.mxu0 0.0
        %v693 = vand.u32 %v627, 4294901760
        %v694 = vsub.f32 %v627, %v693
        %v695 = vand.u32 %v694, 4294901760
        %v696 = vsub.f32 %v694, %v695
        %v697 = vand.u32 %v696, 4294901760
        %698 = vmatmul.mubr.f32.gmra.mrb[0].mxu0 %v697
        %v699 = vpop.f32.mrb[0].mxu0
        %v700 = vadd.f32 0.0, %v699
        %v701 = vpop.f32.mrb[0].mxu0
        %702 = vdwg.mxu0
        %703 = vmatprep.subr.mxu0 0.0
        %704 = vmatpush1.msra.mxu0 0.0
        %705 = vmatprep.subr.mxu0 0.0
        %706 = vmatpush1.msra.mxu0 0.0
        %707 = vmatprep.subr.mxu0 0.0
        %708 = vmatpush1.msra.mxu0 0.0
        %709 = vmatprep.subr.mxu0 0.0
        %710 = vmatpush1.msra.mxu0 0.0
        %711 = vmatprep.subr.mxu0 0.0
        %712 = vmatpush1.msra.mxu0 0.0
        %713 = vmatprep.subr.mxu0 0.0
        %714 = vmatpush1.msra.mxu0 0.0
        %715 = vmatprep.subr.mxu0 0.0
        %716 = vmatpush1.msra.mxu0 0.0
        %717 = vmatprep.subr.mxu0 0.0
        %718 = vmatpush1.msra.mxu0 0.0
        %719 = vmatprep.subr.mxu0 0.0
        %720 = vmatpush1.msra.mxu0 0.0
        %721 = vmatprep.subr.mxu0 0.0
        %722 = vmatpush1.msra.mxu0 0.0
        %723 = vmatprep.subr.mxu0 0.0
        %724 = vmatpush1.msra.mxu0 0.0
        %725 = vmatprep.subr.mxu0 0.0
        %726 = vmatpush1.msra.mxu0 0.0
        %727 = vmatprep.subr.mxu0 0.0
        %728 = vmatpush1.msra.mxu0 0.0
        %729 = vmatprep.subr.mxu0 0.0
        %730 = vmatpush1.msra.mxu0 0.0
        %731 = vmatprep.subr.mxu0 0.0
        %732 = vmatpush1.msra.mxu0 0.0
        %733 = vmatprep.subr.mxu0 0.0
        %734 = vmatpush1.msra.mxu0 0.0
        %735 = vmatprep.subr.mxu0 0.0
        %736 = vmatpush1.msra.mxu0 0.0
        %737 = vmatprep.subr.mxu0 0.0
        %738 = vmatpush1.msra.mxu0 0.0
        %739 = vmatprep.subr.mxu0 0.0
        %740 = vmatpush1.msra.mxu0 0.0
        %741 = vmatprep.subr.mxu0 0.0
        %742 = vmatpush1.msra.mxu0 0.0
        %743 = vmatprep.subr.mxu0 0.0
        %744 = vmatpush1.msra.mxu0 0.0
        %745 = vmatprep.subr.mxu0 0.0
        %746 = vmatpush1.msra.mxu0 0.0
        %747 = vmatprep.subr.mxu0 0.0
        %748 = vmatpush1.msra.mxu0 0.0
        %749 = vmatprep.subr.mxu0 0.0
        %750 = vmatpush1.msra.mxu0 0.0
        %751 = vmatprep.subr.mxu0 0.0
        %752 = vmatpush1.msra.mxu0 0.0
        %753 = vmatprep.subr.mxu0 0.0
        %754 = vmatpush1.msra.mxu0 0.0
        %755 = vmatprep.subr.mxu0 0.0
        %756 = vmatpush1.msra.mxu0 0.0
        %757 = vmatprep.subr.mxu0 0.0
        %758 = vmatpush1.msra.mxu0 0.0
        %759 = vmatprep.subr.mxu0 0.0
        %760 = vmatpush1.msra.mxu0 0.0
        %761 = vmatprep.subr.mxu0 0.0
        %762 = vmatpush1.msra.mxu0 0.0
        %763 = vmatprep.subr.mxu0 0.0
        %764 = vmatpush1.msra.mxu0 0.0
        %765 = vmatprep.subr.mxu0 0.0
        %766 = vmatpush1.msra.mxu0 0.0
        %767 = vmatprep.mubr.f32.mxu0 0.0
        %v768 = vand.u32 %v627, 4294901760
        %769 = vmatmul.mubr.f32.gmra.mrb[0].mxu0 %v768
        %v770 = vpop.f32.mrb[0].mxu0
        %v771 = vadd.f32 %v700, %v770
        %v772 = vpop.f32.mrb[0].mxu0
        %773 = vdwg.mxu0
        %774 = vmatprep.subr.mxu0 0.0
        %775 = vmatpush1.msra.mxu0 0.0
        %776 = vmatprep.subr.mxu0 0.0
        %777 = vmatpush1.msra.mxu0 0.0
        %778 = vmatprep.subr.mxu0 0.0
        %779 = vmatpush1.msra.mxu0 0.0
        %780 = vmatprep.subr.mxu0 0.0
        %781 = vmatpush1.msra.mxu0 0.0
        %782 = vmatprep.subr.mxu0 0.0
        %783 = vmatpush1.msra.mxu0 0.0
        %784 = vmatprep.subr.mxu0 0.0
        %785 = vmatpush1.msra.mxu0 0.0
        %786 = vmatprep.subr.mxu0 0.0
        %787 = vmatpush1.msra.mxu0 0.0
        %788 = vmatprep.subr.mxu0 0.0
        %789 = vmatpush1.msra.mxu0 0.0
        %790 = vmatprep.subr.mxu0 0.0
        %791 = vmatpush1.msra.mxu0 0.0
        %792 = vmatprep.subr.mxu0 0.0
        %793 = vmatpush1.msra.mxu0 0.0
        %794 = vmatprep.subr.mxu0 0.0
        %795 = vmatpush1.msra.mxu0 0.0
        %796 = vmatprep.subr.mxu0 0.0
        %797 = vmatpush1.msra.mxu0 0.0
        %798 = vmatprep.subr.mxu0 0.0
        %799 = vmatpush1.msra.mxu0 0.0
        %800 = vmatprep.subr.mxu0 0.0
        %801 = vmatpush1.msra.mxu0 0.0
        %802 = vmatprep.subr.mxu0 0.0
        %803 = vmatpush1.msra.mxu0 0.0
        %804 = vmatprep.subr.mxu0 0.0
        %805 = vmatpush1.msra.mxu0 0.0
        %806 = vmatprep.subr.mxu0 0.0
        %807 = vmatpush1.msra.mxu0 0.0
        %808 = vmatprep.subr.mxu0 0.0
        %809 = vmatpush1.msra.mxu0 0.0
        %810 = vmatprep.subr.mxu0 0.0
        %811 = vmatpush1.msra.mxu0 0.0
        %812 = vmatprep.subr.mxu0 0.0
        %813 = vmatpush1.msra.mxu0 0.0
        %814 = vmatprep.subr.mxu0 0.0
        %815 = vmatpush1.msra.mxu0 0.0
        %816 = vmatprep.subr.mxu0 0.0
        %817 = vmatpush1.msra.mxu0 0.0
        %818 = vmatprep.subr.mxu0 0.0
        %819 = vmatpush1.msra.mxu0 0.0
        %820 = vmatprep.subr.mxu0 0.0
        %821 = vmatpush1.msra.mxu0 0.0
        %822 = vmatprep.subr.mxu0 0.0
        %823 = vmatpush1.msra.mxu0 0.0
        %824 = vmatprep.subr.mxu0 0.0
        %825 = vmatpush1.msra.mxu0 0.0
        %826 = vmatprep.subr.mxu0 0.0
        %827 = vmatpush1.msra.mxu0 0.0
        %828 = vmatprep.subr.mxu0 0.0
        %829 = vmatpush1.msra.mxu0 0.0
        %830 = vmatprep.subr.mxu0 0.0
        %831 = vmatpush1.msra.mxu0 0.0
        %832 = vmatprep.subr.mxu0 0.0
        %833 = vmatpush1.msra.mxu0 0.0
        %834 = vmatprep.subr.mxu0 0.0
        %835 = vmatpush1.msra.mxu0 0.0
        %836 = vmatprep.subr.mxu0 0.0
        %837 = vmatpush1.msra.mxu0 0.0
        %838 = vmatprep.mubr.f32.mxu0 0.0
        %v839 = vand.u32 %v627, 4294901760
        %v840 = vsub.f32 %v627, %v839
        %841 = vmatmul.mubr.f32.gmra.mrb[0].mxu0 %v840
        %v842 = vpop.f32.mrb[0].mxu0
        %v843 = vadd.f32 %v771, %v842
        %v844 = vpop.f32.mrb[0].mxu0
        %845 = vdwg.mxu0
        %846 = vmatprep.subr.mxu0 0.0
        %847 = vmatpush1.msra.mxu0 1.0
        %848 = vmatprep.subr.mxu0 0.0
        %849 = vmatpush1.msra.mxu0 1.0
        %850 = vmatprep.subr.mxu0 0.0
        %851 = vmatpush1.msra.mxu0 1.0
        %852 = vmatprep.subr.mxu0 0.0
        %853 = vmatpush1.msra.mxu0 1.0
        %854 = vmatprep.subr.mxu0 0.0
        %855 = vmatpush1.msra.mxu0 1.0
        %856 = vmatprep.subr.mxu0 0.0
        %857 = vmatpush1.msra.mxu0 1.0
        %858 = vmatprep.subr.mxu0 0.0
        %859 = vmatpush1.msra.mxu0 1.0
        %860 = vmatprep.subr.mxu0 0.0
        %861 = vmatpush1.msra.mxu0 1.0
        %862 = vmatprep.subr.mxu0 0.0
        %863 = vmatpush1.msra.mxu0 1.0
        %864 = vmatprep.subr.mxu0 0.0
        %865 = vmatpush1.msra.mxu0 1.0
        %866 = vmatprep.subr.mxu0 0.0
        %867 = vmatpush1.msra.mxu0 1.0
        %868 = vmatprep.subr.mxu0 0.0
        %869 = vmatpush1.msra.mxu0 1.0
        %870 = vmatprep.subr.mxu0 0.0
        %871 = vmatpush1.msra.mxu0 1.0
        %872 = vmatprep.subr.mxu0 0.0
        %873 = vmatpush1.msra.mxu0 1.0
        %874 = vmatprep.subr.mxu0 0.0
        %875 = vmatpush1.msra.mxu0 1.0
        %876 = vmatprep.subr.mxu0 0.0
        %877 = vmatpush1.msra.mxu0 1.0
        %878 = vmatprep.subr.mxu0 0.0
        %879 = vmatpush1.msra.mxu0 0.0
        %880 = vmatprep.subr.mxu0 0.0
        %881 = vmatpush1.msra.mxu0 0.0
        %882 = vmatprep.subr.mxu0 0.0
        %883 = vmatpush1.msra.mxu0 0.0
        %884 = vmatprep.subr.mxu0 0.0
        %885 = vmatpush1.msra.mxu0 0.0
        %886 = vmatprep.subr.mxu0 0.0
        %887 = vmatpush1.msra.mxu0 0.0
        %888 = vmatprep.subr.mxu0 0.0
        %889 = vmatpush1.msra.mxu0 0.0
        %890 = vmatprep.subr.mxu0 0.0
        %891 = vmatpush1.msra.mxu0 0.0
        %892 = vmatprep.subr.mxu0 0.0
        %893 = vmatpush1.msra.mxu0 0.0
        %894 = vmatprep.subr.mxu0 0.0
        %895 = vmatpush1.msra.mxu0 0.0
        %896 = vmatprep.subr.mxu0 0.0
        %897 = vmatpush1.msra.mxu0 0.0
        %898 = vmatprep.subr.mxu0 0.0
        %899 = vmatpush1.msra.mxu0 0.0
        %900 = vmatprep.subr.mxu0 0.0
        %901 = vmatpush1.msra.mxu0 0.0
        %902 = vmatprep.subr.mxu0 0.0
        %903 = vmatpush1.msra.mxu0 0.0
        %904 = vmatprep.subr.mxu0 0.0
        %905 = vmatpush1.msra.mxu0 0.0
        %906 = vmatprep.subr.mxu0 0.0
        %907 = vmatpush1.msra.mxu0 0.0
        %908 = vmatprep.subr.mxu0 0.0
        %909 = vmatpush1.msra.mxu0 0.0
        %910 = vmatprep.mubr.f32.mxu0 0.0
        %v911 = vand.u32 %v627, 4294901760
        %v912 = vsub.f32 %v627, %v911
        %v913 = vand.u32 %v912, 4294901760
        %914 = vmatmul.mubr.f32.gmra.mrb[0].mxu0 %v913
        %v915 = vpop.f32.mrb[0].mxu0
        %v916 = vadd.f32 %v843, %v915
        %v917 = vpop.f32.mrb[0].mxu0
        %918 = vdwg.mxu0
        %919 = vmatprep.subr.mxu0 0.0
        %920 = vmatpush1.msra.mxu0 0.0
        %921 = vmatprep.subr.mxu0 0.0
        %922 = vmatpush1.msra.mxu0 0.0
        %923 = vmatprep.subr.mxu0 0.0
        %924 = vmatpush1.msra.mxu0 0.0
        %925 = vmatprep.subr.mxu0 0.0
        %926 = vmatpush1.msra.mxu0 0.0
        %927 = vmatprep.subr.mxu0 0.0
        %928 = vmatpush1.msra.mxu0 0.0
        %929 = vmatprep.subr.mxu0 0.0
        %930 = vmatpush1.msra.mxu0 0.0
        %931 = vmatprep.subr.mxu0 0.0
        %932 = vmatpush1.msra.mxu0 0.0
        %933 = vmatprep.subr.mxu0 0.0
        %934 = vmatpush1.msra.mxu0 0.0
        %935 = vmatprep.subr.mxu0 0.0
        %936 = vmatpush1.msra.mxu0 0.0
        %937 = vmatprep.subr.mxu0 0.0
        %938 = vmatpush1.msra.mxu0 0.0
        %939 = vmatprep.subr.mxu0 0.0
        %940 = vmatpush1.msra.mxu0 0.0
        %941 = vmatprep.subr.mxu0 0.0
        %942 = vmatpush1.msra.mxu0 0.0
        %943 = vmatprep.subr.mxu0 0.0
        %944 = vmatpush1.msra.mxu0 0.0
        %945 = vmatprep.subr.mxu0 0.0
        %946 = vmatpush1.msra.mxu0 0.0
        %947 = vmatprep.subr.mxu0 0.0
        %948 = vmatpush1.msra.mxu0 0.0
        %949 = vmatprep.subr.mxu0 0.0
        %950 = vmatpush1.msra.mxu0 0.0
        %951 = vmatprep.subr.mxu0 0.0
        %952 = vmatpush1.msra.mxu0 0.0
        %953 = vmatprep.subr.mxu0 0.0
        %954 = vmatpush1.msra.mxu0 0.0
        %955 = vmatprep.subr.mxu0 0.0
        %956 = vmatpush1.msra.mxu0 0.0
        %957 = vmatprep.subr.mxu0 0.0
        %958 = vmatpush1.msra.mxu0 0.0
        %959 = vmatprep.subr.mxu0 0.0
        %960 = vmatpush1.msra.mxu0 0.0
        %961 = vmatprep.subr.mxu0 0.0
        %962 = vmatpush1.msra.mxu0 0.0
        %963 = vmatprep.subr.mxu0 0.0
        %964 = vmatpush1.msra.mxu0 0.0
        %965 = vmatprep.subr.mxu0 0.0
        %966 = vmatpush1.msra.mxu0 0.0
        %967 = vmatprep.subr.mxu0 0.0
        %968 = vmatpush1.msra.mxu0 0.0
        %969 = vmatprep.subr.mxu0 0.0
        %970 = vmatpush1.msra.mxu0 0.0
        %971 = vmatprep.subr.mxu0 0.0
        %972 = vmatpush1.msra.mxu0 0.0
        %973 = vmatprep.subr.mxu0 0.0
        %974 = vmatpush1.msra.mxu0 0.0
        %975 = vmatprep.subr.mxu0 0.0
        %976 = vmatpush1.msra.mxu0 0.0
        %977 = vmatprep.subr.mxu0 0.0
        %978 = vmatpush1.msra.mxu0 0.0
        %979 = vmatprep.subr.mxu0 0.0
        %980 = vmatpush1.msra.mxu0 0.0
        %981 = vmatprep.subr.mxu0 0.0
        %982 = vmatpush1.msra.mxu0 0.0
        %983 = vmatprep.mubr.f32.mxu0 0.0
        %v984 = vand.u32 %v627, 4294901760
        %985 = vmatmul.mubr.f32.gmra.mrb[0].mxu0 %v984
        %v986 = vpop.f32.mrb[0].mxu0
        %v987 = vadd.f32 %v916, %v986
        %v988 = vpop.f32.mrb[0].mxu0
        %989 = vdwg.mxu0
        %990 = vmatprep.subr.mxu0 0.0
        %991 = vmatpush1.msra.mxu0 1.0
        %992 = vmatprep.subr.mxu0 0.0
        %993 = vmatpush1.msra.mxu0 1.0
        %994 = vmatprep.subr.mxu0 0.0
        %995 = vmatpush1.msra.mxu0 1.0
        %996 = vmatprep.subr.mxu0 0.0
        %997 = vmatpush1.msra.mxu0 1.0
        %998 = vmatprep.subr.mxu0 0.0
        %999 = vmatpush1.msra.mxu0 1.0
        %1000 = vmatprep.subr.mxu0 0.0
        %1001 = vmatpush1.msra.mxu0 1.0
        %1002 = vmatprep.subr.mxu0 0.0
        %1003 = vmatpush1.msra.mxu0 1.0
        %1004 = vmatprep.subr.mxu0 0.0
        %1005 = vmatpush1.msra.mxu0 1.0
        %1006 = vmatprep.subr.mxu0 0.0
        %1007 = vmatpush1.msra.mxu0 1.0
        %1008 = vmatprep.subr.mxu0 0.0
        %1009 = vmatpush1.msra.mxu0 1.0
        %1010 = vmatprep.subr.mxu0 0.0
        %1011 = vmatpush1.msra.mxu0 1.0
        %1012 = vmatprep.subr.mxu0 0.0
        %1013 = vmatpush1.msra.mxu0 1.0
        %1014 = vmatprep.subr.mxu0 0.0
        %1015 = vmatpush1.msra.mxu0 1.0
        %1016 = vmatprep.subr.mxu0 0.0
        %1017 = vmatpush1.msra.mxu0 1.0
        %1018 = vmatprep.subr.mxu0 0.0
        %1019 = vmatpush1.msra.mxu0 1.0
        %1020 = vmatprep.subr.mxu0 0.0
        %1021 = vmatpush1.msra.mxu0 1.0
        %1022 = vmatprep.subr.mxu0 0.0
        %1023 = vmatpush1.msra.mxu0 0.0
        %1024 = vmatprep.subr.mxu0 0.0
        %1025 = vmatpush1.msra.mxu0 0.0
        %1026 = vmatprep.subr.mxu0 0.0
        %1027 = vmatpush1.msra.mxu0 0.0
        %1028 = vmatprep.subr.mxu0 0.0
        %1029 = vmatpush1.msra.mxu0 0.0
        %1030 = vmatprep.subr.mxu0 0.0
        %1031 = vmatpush1.msra.mxu0 0.0
        %1032 = vmatprep.subr.mxu0 0.0
        %1033 = vmatpush1.msra.mxu0 0.0
        %1034 = vmatprep.subr.mxu0 0.0
        %1035 = vmatpush1.msra.mxu0 0.0
        %1036 = vmatprep.subr.mxu0 0.0
        %1037 = vmatpush1.msra.mxu0 0.0
        %1038 = vmatprep.subr.mxu0 0.0
        %1039 = vmatpush1.msra.mxu0 0.0
        %1040 = vmatprep.subr.mxu0 0.0
        %1041 = vmatpush1.msra.mxu0 0.0
        %1042 = vmatprep.subr.mxu0 0.0
        %1043 = vmatpush1.msra.mxu0 0.0
        %1044 = vmatprep.subr.mxu0 0.0
        %1045 = vmatpush1.msra.mxu0 0.0
        %1046 = vmatprep.subr.mxu0 0.0
        %1047 = vmatpush1.msra.mxu0 0.0
        %1048 = vmatprep.subr.mxu0 0.0
        %1049 = vmatpush1.msra.mxu0 0.0
        %1050 = vmatprep.subr.mxu0 0.0
        %1051 = vmatpush1.msra.mxu0 0.0
        %1052 = vmatprep.subr.mxu0 0.0
        %1053 = vmatpush1.msra.mxu0 0.0
        %1054 = vmatprep.mubr.f32.mxu0 0.0
        %v1055 = vand.u32 %v627, 4294901760
        %1056 = vmatmul.mubr.f32.gmra.mrb[0].mxu0 %v1055
        %v1057 = vpop.f32.mrb[0].mxu0
        %v1058 = vadd.f32 %v987, %v1057
        %v1059 = vpop.f32.mrb[0].mxu0
        %1060 = vdwg.mxu0
        %v1061 = vmul.f32 %v1058, 0.0078125
        %v1062 = vadd.f32 %v1061, 1e-05
        %v1063 = vrsqrt.pop %v1062
        %1065 = vset.pattern.permute.xlu0 0
        %1066 = vperm.xlu0 %1065, %v1063
        %v1067 = vpop.permute.xlu0 %1066
        %v1069 = vmul.f32 %v626, %v1067
        %v1070 = vld [vmem:[%s1] sm:$0x1]
        %v1072 = vlaneseq
        %v1073 = vshrl.u32 %v1072, 7
        %v1074 = vsub.s32 0, %v1073
        %v1075 = vrot.slane %v1070, %v1074
        %v1077 = vmul.f32 %v1069, %v1075
        %v1078 = vld [vmem:[%s2] sm:$0x1]
        %v1080 = vlaneseq
        %v1081 = vshrl.u32 %v1080, 7
        %v1082 = vsub.s32 0, %v1081
        %v1083 = vrot.slane %v1078, %v1082
        %v1085 = vadd.f32 %v1077, %v1083
        %1086 = vst [vmem:[%s185] sm:$0xff] %v1085
        %s1087 = sand.u32 %s96, 1
        %s1088 = scalar_lea.sflag [#allocation4], %s1087
        %s1089 = sand.u32 %s96, 1
        %s1090 = smul.addr %s1089, 8
        %s1091 = scalar_lea.vmem [#allocation5], %s1090
        // Predicated region
        $region37: #{tpu_custom_call.1} parent=31 // pred_check
          %p1092 = pneg %p106
        $region38: #{tpu_custom_call.1} parent=31 // pred_check_branch
          %1094 = sbr.rel (%p1092) target = $region40
        $region39: #{tpu_custom_call.1} parent=31 // pred_region
          %s1096 = ssub.s32 128, 128
          %1097 = vsyncadd %s1088, %s1096
          %s1098 = smul.addr %s20, 128
          %s1099 = scalar_lea.hbm %s3, %s1098
          %s1101 = sshll.u32 %s1091, 4
          %s1102 = int_to_ptr.vmem [resolvable:$true] %s1101
          %1104 = dma.vmem_to_hbm [thread:$0]  %s1102, 128, %s1099, %s1088
        $region40: #{tpu_custom_call.1} parent=31 // pred_fallthru
          _
      $region32: #{tpu_custom_call.1} parent=5 // pred_fallthru
        _
      %p1105 = scmp.le.s32.totalorder 2, %s15
      // Predicated region
      $region41: #{tpu_custom_call.1} parent=5 // pred_check
        %p1106 = pneg %p1105
      $region42: #{tpu_custom_call.1} parent=5 // pred_check_branch
        %1108 = sbr.rel (%p1106) target = $region44
      $region43: #{tpu_custom_call.1} parent=5 // pred_region
        %s1109 = ssub.s32 %s15, 2
        // Predicated region
        $region45: #{tpu_custom_call.1} parent=43 // pred_check
          %p1110 = pneg %p112
        $region46: #{tpu_custom_call.1} parent=43 // pred_check_branch
          %1112 = sbr.rel (%p1110) target = $region48
        $region47: #{tpu_custom_call.1} parent=43 // pred_region
          %s1113 = sand.u32 %s97, 1
          %s1114 = scalar_lea.sflag [#allocation4], %s1113
          %s1115 = sand.u32 %s97, 1
          %s1116 = smul.addr %s1115, 8
          %s1117 = scalar_lea.vmem [#allocation5], %s1116
          %1118 = dma.done %s1114, 128
        $region48: #{tpu_custom_call.1} parent=43 // pred_fallthru
          _
      $region44: #{tpu_custom_call.1} parent=5 // pred_fallthru
        _
    $region6: #{tpu_custom_call.1} parent=1 // loop_footer
      %s19 = sadd.s32 1, %s15
    $region7: #{tpu_custom_call.1} parent=1 // loop_footer_branch
      %14 = sbr.rel target = $region3
    $region8: #{tpu_custom_call.1} parent=1 // loop_exit
      _
    %1119 = vsyncpa [#allocation3], 1
    %s1120 = scalar_lea.sflag [#allocation3], 1
    %1121 = vsyncpa %s1120, 1
    %1122 = vsyncpa [#allocation4], 1
    %s1123 = scalar_lea.sflag [#allocation4], 1
    %1124 = vsyncpa %s1123, 1

</llo_original>
